<compile_context>
chip_gen: v7x
topology: tpu7x:2x2x1
jax: 0.10.0
libtpu: 0.0.40
codegen_flags: <defaults>
</compile_context>

<pallas_src>
import functools

import jax
import jax.numpy as jnp
from jax.experimental import pallas as pl
from jax.experimental.pallas import tpu as pltpu


_SEG = 128      # per-batch-element lane segment (conv2 domain, 122 valid lanes)
_L_IN = 122     # conv2 input/output length (fc(484) forces 4*L - 4 == 484)
_L_HALF = 121   # number of even (= odd) conv3 output positions (242 total)


def _fused_decoder_kernel(x_ref, w2_ref, b2_ref, wab_ref, b3_ref, wfc_ref,
                          bfc_ref, o_ref, xp_ref, c2_ref, y_ref, c3_ref,
                          f_ref, *, nb):
    """Fused conv2+ReLU -> (x2 up) -> conv3+ReLU -> (x2 up) -> fc for nb elems."""
    nbl = nb * _SEG

    # Zero staging buffers: their zero lanes ARE the conv zero-padding and also
    # kill the invalid tail lanes of every 128-lane segment.
    xp_ref[...] = jnp.zeros_like(xp_ref)
    y_ref[...] = jnp.zeros_like(y_ref)

    # ---- stage the input at lane offset +1 per segment (conv2 pad=1), bf16.
    for n in range(nb):
        xp_ref[:, pl.ds(n * _SEG + 1, _L_IN)] = x_ref[n].astype(jnp.bfloat16)

    # ---- conv2 (64->32, k=3, pad=1): one im2col matmul on the MXU.
    # c2 row (k*64 + c) holds the input shifted left by k lanes.
    for k in range(3):
        c2_ref[pl.ds(k * 64, 64), :] = xp_ref[:, pl.ds(k, nbl)]
    y = jnp.dot(w2_ref[...], c2_ref[...], preferred_element_type=jnp.float32)
    y = jnp.maximum(y + b2_ref[...], 0.0)          # bias + ReLU in f32 (VPU)

    # ---- stage conv2 output at lane offset +1 (zero borders double as the
    #      conv3 padding and as the "beyond valid length" zeros).
    for n in range(nb):
        y_ref[:, pl.ds(n * _SEG + 1, _L_IN)] = (
            y[:, n * _SEG:n * _SEG + _L_IN].astype(jnp.bfloat16))

    # ---- conv3 (32->1, k=5, pad=1) with the first x2 upsample folded in:
    # even/odd output phases are two k=3 convs over the conv2 output, computed
    # as one (2,128)@(128, nb*128) matmul against 4 lane-shifted copies.
    for s in range(4):
        c3_ref[pl.ds(s * 32, 32), :] = y_ref[:, pl.ds(s, nbl)]
    z = jnp.dot(wab_ref[...], c3_ref[...], preferred_element_type=jnp.float32)
    h3 = jnp.maximum(z + b3_ref[...], 0.0)         # (2, nb*128): row0 even, row1 odd

    # ---- fc input: per element, [even(128) | odd(128)] lanes, batch on sublanes.
    for n in range(nb):
        f_ref[pl.ds(n, 1), pl.ds(0, _SEG)] = (
            h3[0:1, n * _SEG:(n + 1) * _SEG].astype(jnp.bfloat16))
        f_ref[pl.ds(n, 1), pl.ds(_SEG, _SEG)] = (
            h3[1:2, n * _SEG:(n + 1) * _SEG].astype(jnp.bfloat16))

    # ---- fc (484->494) with the second x2 upsample folded into its weights;
    # the padding rows/cols of wfc are zero, so junk tail lanes contribute 0.
    out = (jnp.dot(f_ref[...], wfc_ref[...], preferred_element_type=jnp.float32)
           + bfc_ref[...])
    o_ref[:, 0, :] = out


def init_params(key):
    """Random parameters in the PyTorch layout of Decoder_classification."""
    k2w, k2b, k3w, k3b, kfw, kfb = jax.random.split(key, 6)
    return {
        "w2": 0.05 * jax.random.normal(k2w, (32, 64, 3), jnp.float32),   # conv2
        "b2": 0.05 * jax.random.normal(k2b, (32,), jnp.float32),
        "w3": 0.05 * jax.random.normal(k3w, (1, 32, 5), jnp.float32),    # conv3
        "b3": 0.05 * jax.random.normal(k3b, (1,), jnp.float32),
        "fw": 0.05 * jax.random.normal(kfw, (494, 484), jnp.float32),    # fc
        "fb": 0.05 * jax.random.normal(kfb, (494,), jnp.float32),
    }


def prepare_params(params):
    """One-time weight preprocessing, hoisted out of the forward path."""
    f32 = jnp.float32

    # conv2 -> im2col layout [cout, k*64 + cin].
    w2 = params["w2"].astype(f32)                                    # (32, 64, 3)
    w2m = jnp.transpose(w2, (0, 2, 1)).reshape(32, 192)
    b2 = params["b2"].astype(f32).reshape(32, 1)

    # conv3 with the first x2 nearest upsample folded in.
    #   z[2m]   = sum_c  w3[c,0]*y[m-1] + (w3[c,1]+w3[c,2])*y[m] + (w3[c,3]+w3[c,4])*y[m+1]
    #   z[2m+1] = sum_c (w3[c,0]+w3[c,1])*y[m] + (w3[c,2]+w3[c,3])*y[m+1] + w3[c,4]*y[m+2]
    # Packed against 4 shifted copies of y (shifts 0..3, y stored at +1 offset).
    w3 = params["w3"].astype(f32)[0]                                 # (32, 5)
    a_even = jnp.stack([w3[:, 0], w3[:, 1] + w3[:, 2], w3[:, 3] + w3[:, 4]], 0)
    a_odd = jnp.stack([w3[:, 0] + w3[:, 1], w3[:, 2] + w3[:, 3], w3[:, 4]], 0)
    zeros32 = jnp.zeros((1, 32), f32)
    row_even = jnp.concatenate([a_even[0:1], a_even[1:2], a_even[2:3], zeros32], 1)
    row_odd = jnp.concatenate([zeros32, a_odd[0:1], a_odd[1:2], a_odd[2:3]], 1)
    wab = jnp.concatenate([row_even, row_odd], 0)                    # (2, 128)
    b3 = jnp.full((2, 1), params["b3"].astype(f32)[0])

    # fc with the second x2 nearest upsample folded in:
    #   fc(repeat(h,2)) == h @ (W[:,0::2] + W[:,1::2]).T
    # Rows reordered into [even | odd] halves, zero-padded to (256, 512).
    fw = params["fw"].astype(f32)                                    # (494, 484)
    wfold = fw[:, 0::2] + fw[:, 1::2]                                # (494, 242)
    wfc = jnp.zeros((256, 512), f32)
    wfc = wfc.at[0:_L_HALF, 0:494].set(wfold[:, 0::2].T)             # even l
    wfc = wfc.at[128:128 + _L_HALF, 0:494].set(wfold[:, 1::2].T)     # odd l
    bfc = jnp.zeros((1, 512), f32).at[0, 0:494].set(params["fb"].astype(f32))

    return {
        "w2m": w2m.astype(jnp.bfloat16), "b2": b2,
        "wab": wab.astype(jnp.bfloat16), "b3": b3,
        "wfc": wfc.astype(jnp.bfloat16), "bfc": bfc,
    }


@jax.jit
def decoder_classification_forward(x, kparams):
    """x: (N, 64, 122) float32 -> (N, 1, 494) float32."""
    n, c, l = x.shape
    assert c == 64 and l == _L_IN, (c, l)
    g = 2 if (n >= 2 and n % 2 == 0) else 1   # 2 parallel steps -> both v7x TCs
    nb = n // g
    nbl = nb * _SEG

    kernel = functools.partial(_fused_decoder_kernel, nb=nb)
    out = pl.pallas_call(
        kernel,
        out_shape=jax.ShapeDtypeStruct((n, 1, 512), jnp.float32),
        grid=(g,),
        in_specs=[
            pl.BlockSpec((nb, 64, _L_IN), lambda i: (i, 0, 0)),   # x block
            pl.BlockSpec((32, 192), lambda i: (0, 0)),            # conv2 weight
            pl.BlockSpec((32, 1), lambda i: (0, 0)),              # conv2 bias
            pl.BlockSpec((2, 128), lambda i: (0, 0)),             # conv3 even/odd w
            pl.BlockSpec((2, 1), lambda i: (0, 0)),               # conv3 bias
            pl.BlockSpec((256, 512), lambda i: (0, 0)),           # folded fc weight
            pl.BlockSpec((1, 512), lambda i: (0, 0)),             # fc bias
        ],
        out_specs=pl.BlockSpec((nb, 1, 512), lambda i: (i, 0, 0)),
        scratch_shapes=[
            pltpu.VMEM((64, nbl + 128), jnp.bfloat16),   # padded conv2 input
            pltpu.VMEM((192, nbl), jnp.bfloat16),        # conv2 im2col columns
            pltpu.VMEM((32, nbl + 128), jnp.bfloat16),   # staged conv2 output (+1)
            pltpu.VMEM((128, nbl), jnp.bfloat16),        # conv3 im2col columns
            pltpu.VMEM((nb, 256), jnp.bfloat16),         # fc inputs (batch on M)
        ],
        compiler_params=pltpu.CompilerParams(
            dimension_semantics=("parallel",)),
    )(x.astype(jnp.float32), kparams["w2m"], kparams["b2"], kparams["wab"],
      kparams["b3"], kparams["wfc"], kparams["bfc"])
    return out[:, :, :494]


if __name__ == "__main__":
    key = jax.random.PRNGKey(0)
    pkey, xkey = jax.random.split(key)
    params = init_params(pkey)
    kparams = prepare_params(params)   # one-time weight prep, not per call
    # Decoder input: 64 channels from the encoder; fc(484) forces L = 122.
    x = jax.random.normal(xkey, (2, 64, _L_IN), jnp.float32)

    out = decoder_classification_forward(x, kparams)
    out = jax.block_until_ready(out)
    assert out.shape == (2, 1, 494), out.shape
    assert out.dtype == jnp.float32
    print("KERNEL_OK")
</pallas_src>

<mosaic_0001>
module attributes {stable_mosaic.version = 11 : i64} {
  func.func @_fused_decoder_kernel(%arg0: i32, %arg1: memref<1x64x122xf32, #tpu.memory_space<vmem>>, %arg2: memref<32x192xbf16, #tpu.memory_space<vmem>>, %arg3: memref<32x1xf32, #tpu.memory_space<vmem>>, %arg4: memref<2x128xbf16, #tpu.memory_space<vmem>>, %arg5: memref<2x1xf32, #tpu.memory_space<vmem>>, %arg6: memref<256x512xbf16, #tpu.memory_space<vmem>>, %arg7: memref<1x512xf32, #tpu.memory_space<vmem>>, %arg8: memref<1x1x512xf32, #tpu.memory_space<vmem>>, %arg9: memref<64x256xbf16, #tpu.memory_space<vmem>>, %arg10: memref<192x128xbf16, #tpu.memory_space<vmem>>, %arg11: memref<32x256xbf16, #tpu.memory_space<vmem>>, %arg12: memref<128x128xbf16, #tpu.memory_space<vmem>>, %arg13: memref<1x256xbf16, #tpu.memory_space<vmem>>) attributes {dimension_semantics = [#tpu.dimension_semantics<parallel>], iteration_bounds = array<i64: 2>, scalar_prefetch = 0 : i64, scratch_operands = 5 : i64, tpu.core_type = #tpu.core_type<tc>, window_params = [{transform_indices = @transform_0, window_bounds = array<i64: 1, 64, 122>}, {pipeline_mode = #tpu.pipeline_mode<synchronous>, transform_indices = @transform_1, window_bounds = array<i64: 32, 192>}, {pipeline_mode = #tpu.pipeline_mode<synchronous>, transform_indices = @transform_2, window_bounds = array<i64: 32, 1>}, {pipeline_mode = #tpu.pipeline_mode<synchronous>, transform_indices = @transform_3, window_bounds = array<i64: 2, 128>}, {pipeline_mode = #tpu.pipeline_mode<synchronous>, transform_indices = @transform_4, window_bounds = array<i64: 2, 1>}, {pipeline_mode = #tpu.pipeline_mode<synchronous>, transform_indices = @transform_5, window_bounds = array<i64: 256, 512>}, {pipeline_mode = #tpu.pipeline_mode<synchronous>, transform_indices = @transform_6, window_bounds = array<i64: 1, 512>}, {transform_indices = @transform_7, window_bounds = array<i64: 1, 1, 512>}]} {
    %cst = arith.constant 0.000000e+00 : bf16
    %0 = vector.broadcast %cst : bf16 to vector<64x256xbf16>
    %c0 = arith.constant 0 : index
    %c0_0 = arith.constant 0 : index
    %1 = vector.load %arg9[%c0, %c0_0] : memref<64x256xbf16, #tpu.memory_space<vmem>>, vector<64x256xbf16>
    tpu.vector_store %arg9[%c0, %c0_0], %0 {strides = array<i32>} : memref<64x256xbf16, #tpu.memory_space<vmem>>, vector<64x256xbf16>,
    %cst_1 = arith.constant 0.000000e+00 : bf16
    %2 = vector.broadcast %cst_1 : bf16 to vector<32x256xbf16>
    %c0_2 = arith.constant 0 : index
    %c0_3 = arith.constant 0 : index
    %3 = vector.load %arg11[%c0_2, %c0_3] : memref<32x256xbf16, #tpu.memory_space<vmem>>, vector<32x256xbf16>
    tpu.vector_store %arg11[%c0_2, %c0_3], %2 {strides = array<i32>} : memref<32x256xbf16, #tpu.memory_space<vmem>>, vector<32x256xbf16>,
    %c0_4 = arith.constant 0 : index
    %c0_5 = arith.constant 0 : index
    %c0_6 = arith.constant 0 : index
    %4 = vector.load %arg1[%c0_4, %c0_5, %c0_6] : memref<1x64x122xf32, #tpu.memory_space<vmem>>, vector<1x64x122xf32>
    %5 = vector.shape_cast %4 : vector<1x64x122xf32> to vector<64x122xf32>
    %6 = arith.truncf %5 : vector<64x122xf32> to vector<64x122xbf16>
    %c0_7 = arith.constant 0 : index
    %c1 = arith.constant 1 : index
    %7 = vector.load %arg9[%c0_7, %c1] : memref<64x256xbf16, #tpu.memory_space<vmem>>, vector<64x122xbf16>
    tpu.vector_store %arg9[%c0_7, %c1], %6 {strides = array<i32>} : memref<64x256xbf16, #tpu.memory_space<vmem>>, vector<64x122xbf16>,
    %c0_8 = arith.constant 0 : index
    %c0_9 = arith.constant 0 : index
    %8 = vector.load %arg9[%c0_8, %c0_9] : memref<64x256xbf16, #tpu.memory_space<vmem>>, vector<64x128xbf16>
    %c0_10 = arith.constant 0 : index
    %c0_11 = arith.constant 0 : index
    %9 = vector.load %arg10[%c0_10, %c0_11] : memref<192x128xbf16, #tpu.memory_space<vmem>>, vector<64x128xbf16>
    tpu.vector_store %arg10[%c0_10, %c0_11], %8 {strides = array<i32>} : memref<192x128xbf16, #tpu.memory_space<vmem>>, vector<64x128xbf16>,
    %c0_12 = arith.constant 0 : index
    %c1_13 = arith.constant 1 : index
    %10 = vector.load %arg9[%c0_12, %c1_13] : memref<64x256xbf16, #tpu.memory_space<vmem>>, vector<64x128xbf16>
    %c64 = arith.constant 64 : index
    %c0_14 = arith.constant 0 : index
    %11 = vector.load %arg10[%c64, %c0_14] : memref<192x128xbf16, #tpu.memory_space<vmem>>, vector<64x128xbf16>
    tpu.vector_store %arg10[%c64, %c0_14], %10 {strides = array<i32>} : memref<192x128xbf16, #tpu.memory_space<vmem>>, vector<64x128xbf16>,
    %c0_15 = arith.constant 0 : index
    %c2 = arith.constant 2 : index
    %12 = vector.load %arg9[%c0_15, %c2] : memref<64x256xbf16, #tpu.memory_space<vmem>>, vector<64x128xbf16>
    %c128 = arith.constant 128 : index
    %c0_16 = arith.constant 0 : index
    %13 = vector.load %arg10[%c128, %c0_16] : memref<192x128xbf16, #tpu.memory_space<vmem>>, vector<64x128xbf16>
    tpu.vector_store %arg10[%c128, %c0_16], %12 {strides = array<i32>} : memref<192x128xbf16, #tpu.memory_space<vmem>>, vector<64x128xbf16>,
    %c0_17 = arith.constant 0 : index
    %c0_18 = arith.constant 0 : index
    %14 = vector.load %arg2[%c0_17, %c0_18] : memref<32x192xbf16, #tpu.memory_space<vmem>>, vector<32x192xbf16>
    %c0_19 = arith.constant 0 : index
    %c0_20 = arith.constant 0 : index
    %15 = vector.load %arg10[%c0_19, %c0_20] : memref<192x128xbf16, #tpu.memory_space<vmem>>, vector<192x128xbf16>
    %cst_21 = arith.constant dense<0.000000e+00> : vector<32x128xf32>
    %16 = tpu.matmul %14, %15, %cst_21 {dimension_numbers = #tpu.dot_dimension_numbers<[1], [0], [0], [1], [0, 0, 1, 1], [], []>} : vector<32x192xbf16>, vector<192x128xbf16>, vector<32x128xf32> -> vector<32x128xf32>
    %c0_22 = arith.constant 0 : index
    %c0_23 = arith.constant 0 : index
    %17 = vector.load %arg3[%c0_22, %c0_23] : memref<32x1xf32, #tpu.memory_space<vmem>>, vector<32x1xf32>
    %18 = vector.broadcast %17 : vector<32x1xf32> to vector<32x128xf32>
    %19 = arith.addf %16, %18 : vector<32x128xf32>
    %cst_24 = arith.constant 0.000000e+00 : f32
    %20 = vector.broadcast %cst_24 : f32 to vector<32x128xf32>
    %21 = arith.maximumf %19, %20 : vector<32x128xf32>
    %22 = vector.extract_strided_slice %21 {offsets = [0, 0], sizes = [32, 122], strides = [1, 1]} : vector<32x128xf32> to vector<32x122xf32>
    %23 = arith.truncf %22 : vector<32x122xf32> to vector<32x122xbf16>
    %c0_25 = arith.constant 0 : index
    %c1_26 = arith.constant 1 : index
    %24 = vector.load %arg11[%c0_25, %c1_26] : memref<32x256xbf16, #tpu.memory_space<vmem>>, vector<32x122xbf16>
    tpu.vector_store %arg11[%c0_25, %c1_26], %23 {strides = array<i32>} : memref<32x256xbf16, #tpu.memory_space<vmem>>, vector<32x122xbf16>,
    %c0_27 = arith.constant 0 : index
    %c0_28 = arith.constant 0 : index
    %25 = vector.load %arg11[%c0_27, %c0_28] : memref<32x256xbf16, #tpu.memory_space<vmem>>, vector<32x128xbf16>
    %c0_29 = arith.constant 0 : index
    %c0_30 = arith.constant 0 : index
    %26 = vector.load %arg12[%c0_29, %c0_30] : memref<128x128xbf16, #tpu.memory_space<vmem>>, vector<32x128xbf16>
    tpu.vector_store %arg12[%c0_29, %c0_30], %25 {strides = array<i32>} : memref<128x128xbf16, #tpu.memory_space<vmem>>, vector<32x128xbf16>,
    %c0_31 = arith.constant 0 : index
    %c1_32 = arith.constant 1 : index
    %27 = vector.load %arg11[%c0_31, %c1_32] : memref<32x256xbf16, #tpu.memory_space<vmem>>, vector<32x128xbf16>
    %c32 = arith.constant 32 : index
    %c0_33 = arith.constant 0 : index
    %28 = vector.load %arg12[%c32, %c0_33] : memref<128x128xbf16, #tpu.memory_space<vmem>>, vector<32x128xbf16>
    tpu.vector_store %arg12[%c32, %c0_33], %27 {strides = array<i32>} : memref<128x128xbf16, #tpu.memory_space<vmem>>, vector<32x128xbf16>,
    %c0_34 = arith.constant 0 : index
    %c2_35 = arith.constant 2 : index
    %29 = vector.load %arg11[%c0_34, %c2_35] : memref<32x256xbf16, #tpu.memory_space<vmem>>, vector<32x128xbf16>
    %c64_36 = arith.constant 64 : index
    %c0_37 = arith.constant 0 : index
    %30 = vector.load %arg12[%c64_36, %c0_37] : memref<128x128xbf16, #tpu.memory_space<vmem>>, vector<32x128xbf16>
    tpu.vector_store %arg12[%c64_36, %c0_37], %29 {strides = array<i32>} : memref<128x128xbf16, #tpu.memory_space<vmem>>, vector<32x128xbf16>,
    %c0_38 = arith.constant 0 : index
    %c3 = arith.constant 3 : index
    %31 = vector.load %arg11[%c0_38, %c3] : memref<32x256xbf16, #tpu.memory_space<vmem>>, vector<32x128xbf16>
    %c96 = arith.constant 96 : index
    %c0_39 = arith.constant 0 : index
    %32 = vector.load %arg12[%c96, %c0_39] : memref<128x128xbf16, #tpu.memory_space<vmem>>, vector<32x128xbf16>
    tpu.vector_store %arg12[%c96, %c0_39], %31 {strides = array<i32>} : memref<128x128xbf16, #tpu.memory_space<vmem>>, vector<32x128xbf16>,
    %c0_40 = arith.constant 0 : index
    %c0_41 = arith.constant 0 : index
    %33 = vector.load %arg4[%c0_40, %c0_41] : memref<2x128xbf16, #tpu.memory_space<vmem>>, vector<2x128xbf16>
    %c0_42 = arith.constant 0 : index
    %c0_43 = arith.constant 0 : index
    %34 = vector.load %arg12[%c0_42, %c0_43] : memref<128x128xbf16, #tpu.memory_space<vmem>>, vector<128x128xbf16>
    %cst_44 = arith.constant dense<0.000000e+00> : vector<2x128xf32>
    %35 = tpu.matmul %33, %34, %cst_44 {dimension_numbers = #tpu.dot_dimension_numbers<[1], [0], [0], [1], [0, 0, 1, 1], [], []>} : vector<2x128xbf16>, vector<128x128xbf16>, vector<2x128xf32> -> vector<2x128xf32>
    %c0_45 = arith.constant 0 : index
    %c0_46 = arith.constant 0 : index
    %36 = vector.load %arg5[%c0_45, %c0_46] : memref<2x1xf32, #tpu.memory_space<vmem>>, vector<2x1xf32>
    %37 = vector.broadcast %36 : vector<2x1xf32> to vector<2x128xf32>
    %38 = arith.addf %35, %37 : vector<2x128xf32>
    %cst_47 = arith.constant 0.000000e+00 : f32
    %39 = vector.broadcast %cst_47 : f32 to vector<2x128xf32>
    %40 = arith.maximumf %38, %39 : vector<2x128xf32>
    %41 = vector.extract_strided_slice %40 {offsets = [0, 0], sizes = [1, 128], strides = [1, 1]} : vector<2x128xf32> to vector<1x128xf32>
    %42 = arith.truncf %41 : vector<1x128xf32> to vector<1x128xbf16>
    %c0_48 = arith.constant 0 : index
    %c0_49 = arith.constant 0 : index
    %43 = vector.load %arg13[%c0_48, %c0_49] : memref<1x256xbf16, #tpu.memory_space<vmem>>, vector<1x128xbf16>
    tpu.vector_store %arg13[%c0_48, %c0_49], %42 {strides = array<i32>} : memref<1x256xbf16, #tpu.memory_space<vmem>>, vector<1x128xbf16>,
    %44 = vector.extract_strided_slice %40 {offsets = [1, 0], sizes = [1, 128], strides = [1, 1]} : vector<2x128xf32> to vector<1x128xf32>
    %45 = arith.truncf %44 : vector<1x128xf32> to vector<1x128xbf16>
    %c0_50 = arith.constant 0 : index
    %c128_51 = arith.constant 128 : index
    %46 = vector.load %arg13[%c0_50, %c128_51] : memref<1x256xbf16, #tpu.memory_space<vmem>>, vector<1x128xbf16>
    tpu.vector_store %arg13[%c0_50, %c128_51], %45 {strides = array<i32>} : memref<1x256xbf16, #tpu.memory_space<vmem>>, vector<1x128xbf16>,
    %c0_52 = arith.constant 0 : index
    %c0_53 = arith.constant 0 : index
    %47 = vector.load %arg13[%c0_52, %c0_53] : memref<1x256xbf16, #tpu.memory_space<vmem>>, vector<1x256xbf16>
    %c0_54 = arith.constant 0 : index
    %c0_55 = arith.constant 0 : index
    %48 = vector.load %arg6[%c0_54, %c0_55] : memref<256x512xbf16, #tpu.memory_space<vmem>>, vector<256x512xbf16>
    %cst_56 = arith.constant dense<0.000000e+00> : vector<1x512xf32>
    %49 = tpu.matmul %47, %48, %cst_56 {dimension_numbers = #tpu.dot_dimension_numbers<[1], [0], [0], [1], [0, 0, 1, 1], [], []>} : vector<1x256xbf16>, vector<256x512xbf16>, vector<1x512xf32> -> vector<1x512xf32>
    %c0_57 = arith.constant 0 : index
    %c0_58 = arith.constant 0 : index
    %50 = vector.load %arg7[%c0_57, %c0_58] : memref<1x512xf32, #tpu.memory_space<vmem>>, vector<1x512xf32>
    %51 = arith.addf %49, %50 : vector<1x512xf32>
    %c0_59 = arith.constant 0 : index
    %c0_60 = arith.constant 0 : index
    %c0_61 = arith.constant 0 : index
    %52 = vector.load %arg8[%c0_59, %c0_60, %c0_61] : memref<1x1x512xf32, #tpu.memory_space<vmem>>, vector<1x1x512xf32>
    %53 = vector.shape_cast %52 : vector<1x1x512xf32> to vector<1x512xf32>
    %54 = vector.shape_cast %51 : vector<1x512xf32> to vector<1x1x512xf32>
    tpu.vector_store %arg8[%c0_59, %c0_60, %c0_61], %54 {strides = array<i32>} : memref<1x1x512xf32, #tpu.memory_space<vmem>>, vector<1x1x512xf32>,
    return
  }
  func.func @transform_0(%arg0: i32) -> (i32, i32, i32) {
    %c0_i32 = arith.constant 0 : i32
    %c0_i32_0 = arith.constant 0 : i32
    %c0_i32_1 = arith.constant 0 : i32
    return %arg0, %c0_i32, %c0_i32_0 : i32, i32, i32
  }
  func.func @transform_1(%arg0: i32) -> (i32, i32) {
    %c0_i32 = arith.constant 0 : i32
    %c0_i32_0 = arith.constant 0 : i32
    %c0_i32_1 = arith.constant 0 : i32
    return %c0_i32, %c0_i32_0 : i32, i32
  }
  func.func @transform_2(%arg0: i32) -> (i32, i32) {
    %c0_i32 = arith.constant 0 : i32
    %c0_i32_0 = arith.constant 0 : i32
    %c0_i32_1 = arith.constant 0 : i32
    return %c0_i32, %c0_i32_0 : i32, i32
  }
  func.func @transform_3(%arg0: i32) -> (i32, i32) {
    %c0_i32 = arith.constant 0 : i32
    %c0_i32_0 = arith.constant 0 : i32
    %c0_i32_1 = arith.constant 0 : i32
    return %c0_i32, %c0_i32_0 : i32, i32
  }
  func.func @transform_4(%arg0: i32) -> (i32, i32) {
    %c0_i32 = arith.constant 0 : i32
    %c0_i32_0 = arith.constant 0 : i32
    %c0_i32_1 = arith.constant 0 : i32
    return %c0_i32, %c0_i32_0 : i32, i32
  }
  func.func @transform_5(%arg0: i32) -> (i32, i32) {
    %c0_i32 = arith.constant 0 : i32
    %c0_i32_0 = arith.constant 0 : i32
    %c0_i32_1 = arith.constant 0 : i32
    return %c0_i32, %c0_i32_0 : i32, i32
  }
  func.func @transform_6(%arg0: i32) -> (i32, i32) {
    %c0_i32 = arith.constant 0 : i32
    %c0_i32_0 = arith.constant 0 : i32
    %c0_i32_1 = arith.constant 0 : i32
    return %c0_i32, %c0_i32_0 : i32, i32
  }
  func.func @transform_7(%arg0: i32) -> (i32, i32, i32) {
    %c0_i32 = arith.constant 0 : i32
    %c0_i32_0 = arith.constant 0 : i32
    %c0_i32_1 = arith.constant 0 : i32
    return %arg0, %c0_i32, %c0_i32_0 : i32, i32, i32
  }
}

</mosaic_0001>

<llo_original>
// kernel: decoder_classification_forward.1
$region0: #{decoder_classification_forward.1}
  #allocation0 [shape = 'u32[]', space=smem, size = 0x4, offset = 0x4, fixed_abs, tag = 'smem constant byte address 0x4 - core index']
  #allocation1 [shape = 'u32[144,128]{1,0:T(1,128)}', space=vmem, size = 0x12000, scoped, tag = 'internal scratch']
  #allocation2 [shape = 'bf16[64,256]{1,0:T(16,128)(2,1)}', space=vmem, size = 0x8000, scoped, tag = 'scratch operand']
  #allocation3 [shape = 'bf16[192,128]{1,0:T(16,128)(2,1)}', space=vmem, size = 0xc000, scoped, tag = 'scratch operand']
  #allocation4 [shape = 'bf16[32,256]{1,0:T(16,128)(2,1)}', space=vmem, size = 0x4000, scoped, tag = 'scratch operand']
  #allocation5 [shape = 'bf16[128,128]{1,0:T(16,128)(2,1)}', space=vmem, size = 0x8000, scoped, tag = 'scratch operand']
  #allocation6 [shape = 'bf16[1,256]{1,0:T(2,128)(2,1)}', space=vmem, size = 0x400, scoped, tag = 'scratch operand']
  %s0 = inlined_call_operand.hbm [shape: f32[2,64,122], index: 0, kind: input, shape index: {}]
  %s1 = inlined_call_operand.vmem [shape: bf16[32,192], index: 1, kind: input, shape index: {}]
  %s2 = inlined_call_operand.vmem [shape: f32[32,1], index: 2, kind: input, shape index: {}]
  %s3 = inlined_call_operand.vmem [shape: bf16[2,128], index: 3, kind: input, shape index: {}]
  %s4 = inlined_call_operand.vmem [shape: f32[2,1], index: 4, kind: input, shape index: {}]
  %s5 = inlined_call_operand.hbm [shape: bf16[256,512], index: 5, kind: input, shape index: {}]
  %s6 = inlined_call_operand.vmem [shape: f32[1,512], index: 6, kind: input, shape index: {}]
  %s7 = inlined_call_operand.hbm [shape: f32[2,1,512], index: 7, kind: output, shape index: {}]
  %s8 = sld [smem:[#allocation0]]
  $region69: #{decoder_classification_forward.1} parent=0
    _
  %s10 = ssub.s32 1, %s8
  %s11 = scalar_select 0, %s10, %s8
  $region1: #{decoder_classification_forward.1} parent=0
    #allocation7 [shape = 'u8[65536]{0}', space=vmem, size = 0x10000, scoped, tag = 'input window, operand 0']
    #allocation8 [shape = 's32[2]{0}', space=sflag, size = 0x8, scoped, tag = 'scoped memory for decoder_classification_forward.1']
    #allocation9 [shape = 's32[2]{0}', space=sflag, size = 0x8, scoped, tag = 'scoped memory for decoder_classification_forward.1']
    #allocation10 [shape = 'u8[262144]{0}', space=vmem, size = 0x40000, scoped, tag = 'input window, operand 5, single buffered']
    #allocation11 [shape = 's32[1]{0}', space=sflag, size = 0x4, scoped, tag = 'scoped memory for decoder_classification_forward.1']
    #allocation12 [shape = 'u8[4096]{0}', space=vmem, size = 0x1000, scoped, tag = 'output window, operand 0']
    %12 = vsyncpa [#allocation8], 0
    %s13 = scalar_lea.sflag [#allocation8], 1
    %14 = vsyncpa %s13, 0
    %15 = vsyncpa [#allocation11], 0
    %16 = vsyncpa [#allocation9], 0
    %s17 = scalar_lea.sflag [#allocation9], 1
    %18 = vsyncpa %s17, 0
    loop: start=0, step=1, limit=4
    $region2: #{decoder_classification_forward.1} parent=1 // loop_pre_header
      _
    $region3: #{decoder_classification_forward.1} parent=1 // loop_header
      %s20 = sphi 0, %s24
      %p21 = scmp.ge.s32.totalorder %s20, 4
      %s30 = sphi 0, %s32
      %s33 = sphi 0, %s30
      %s34 = sphi 0, %s33
      %s50 = sphi 0, %s34
      %s54 = sphi 0, %s54
      %s56 = sphi 0, %s54
      %s57 = sphi 0, %s56
      %s71 = sphi 0, %s57
      %s75 = sphi 0, %s75
      %s77 = sphi 0, %s75
      %s78 = sphi 0, %s77
      %s92 = sphi 0, %s78
      %s96 = sphi 0, %s96
      %s98 = sphi 0, %s96
      %s99 = sphi 0, %s98
      %s113 = sphi 0, %s99
      %s117 = sphi 0, %s117
      %s119 = sphi 0, %s117
      %s120 = sphi 0, %s119
      %s134 = sphi 0, %s120
      %s138 = sphi 0, %s138
      %s140 = sphi 0, %s138
      %s141 = sphi 0, %s140
      %s155 = sphi 0, %s141
      %s159 = sphi 0, %s159
      %s161 = sphi 0, %s159
      %s162 = sphi 0, %s161
      %s176 = sphi 0, %s162
      %s182 = sphi 0, %s184
      %s185 = sphi 0, %s182
      %s186 = sphi 0, %s185
      %s202 = sphi 0, %s186
    $region4: #{decoder_classification_forward.1} parent=1 // loop_header_branch
      %23 = sbr.rel (%p21) target = $region8
    $region5: #{decoder_classification_forward.1} parent=1 // loop_body
      %s25 = ssub.s32 %s20, 1
      %s26 = ssub.s32 %s20, 2
      %s27 = sadd.s32 %s20, 1
      %s28 = ssub.s32 %s20, %s27
      %p29 = scmp.eq.s32.totalorder %s28, 0
      %s31 = sadd.s32 %s30, 1
      %s32 = scalar_select %p29, %s30, %s31
      %p35 = pneg %p29
      %p36 = scmp.eq.s32.totalorder %s20, 1
      %p37 = por %p35, %p36
      %p38 = scmp.ne.s32.totalorder %s30, %s33
      %p39 = scmp.eq.s32.totalorder %s20, 0
      %p40 = por %p38, %p39
      %p41 = scmp.ne.s32.totalorder %s30, %s33
      %p42 = scmp.eq.s32.totalorder %s25, 1
      %p43 = por %p41, %p42
      %p44 = scmp.ne.s32.totalorder %s33, %s34
      %p45 = scmp.eq.s32.totalorder %s25, 0
      %p46 = por %p44, %p45
      %p47 = scmp.ne.s32.totalorder %s33, %s34
      %p48 = scmp.eq.s32.totalorder %s26, 1
      %p49 = por %p47, %p48
      %p51 = scmp.ne.s32.totalorder %s34, %s50
      %p52 = scmp.eq.s32.totalorder %s26, 0
      %p53 = por %p51, %p52
      %s55 = sadd.s32 %s54, 1
      %p58 = scmp.eq.s32.totalorder %s20, 1
      %p59 = scmp.ne.s32.totalorder %s54, %s56
      %p60 = scmp.eq.s32.totalorder %s20, 0
      %p61 = por %p59, %p60
      %p62 = scmp.ne.s32.totalorder %s54, %s56
      %p63 = scmp.eq.s32.totalorder %s25, 1
      %p64 = por %p62, %p63
      %p65 = scmp.ne.s32.totalorder %s56, %s57
      %p66 = scmp.eq.s32.totalorder %s25, 0
      %p67 = por %p65, %p66
      %p68 = scmp.ne.s32.totalorder %s56, %s57
      %p69 = scmp.eq.s32.totalorder %s26, 1
      %p70 = por %p68, %p69
      %p72 = scmp.ne.s32.totalorder %s57, %s71
      %p73 = scmp.eq.s32.totalorder %s26, 0
      %p74 = por %p72, %p73
      %s76 = sadd.s32 %s75, 1
      %p79 = scmp.eq.s32.totalorder %s20, 1
      %p80 = scmp.ne.s32.totalorder %s75, %s77
      %p81 = scmp.eq.s32.totalorder %s20, 0
      %p82 = por %p80, %p81
      %p83 = scmp.ne.s32.totalorder %s75, %s77
      %p84 = scmp.eq.s32.totalorder %s25, 1
      %p85 = por %p83, %p84
      %p86 = scmp.ne.s32.totalorder %s77, %s78
      %p87 = scmp.eq.s32.totalorder %s25, 0
      %p88 = por %p86, %p87
      %p89 = scmp.ne.s32.totalorder %s77, %s78
      %p90 = scmp.eq.s32.totalorder %s26, 1
      %p91 = por %p89, %p90
      %p93 = scmp.ne.s32.totalorder %s78, %s92
      %p94 = scmp.eq.s32.totalorder %s26, 0
      %p95 = por %p93, %p94
      %s97 = sadd.s32 %s96, 1
      %p100 = scmp.eq.s32.totalorder %s20, 1
      %p101 = scmp.ne.s32.totalorder %s96, %s98
      %p102 = scmp.eq.s32.totalorder %s20, 0
      %p103 = por %p101, %p102
      %p104 = scmp.ne.s32.totalorder %s96, %s98
      %p105 = scmp.eq.s32.totalorder %s25, 1
      %p106 = por %p104, %p105
      %p107 = scmp.ne.s32.totalorder %s98, %s99
      %p108 = scmp.eq.s32.totalorder %s25, 0
      %p109 = por %p107, %p108
      %p110 = scmp.ne.s32.totalorder %s98, %s99
      %p111 = scmp.eq.s32.totalorder %s26, 1
      %p112 = por %p110, %p111
      %p114 = scmp.ne.s32.totalorder %s99, %s113
      %p115 = scmp.eq.s32.totalorder %s26, 0
      %p116 = por %p114, %p115
      %s118 = sadd.s32 %s117, 1
      %p121 = scmp.eq.s32.totalorder %s20, 1
      %p122 = scmp.ne.s32.totalorder %s117, %s119
      %p123 = scmp.eq.s32.totalorder %s20, 0
      %p124 = por %p122, %p123
      %p125 = scmp.ne.s32.totalorder %s117, %s119
      %p126 = scmp.eq.s32.totalorder %s25, 1
      %p127 = por %p125, %p126
      %p128 = scmp.ne.s32.totalorder %s119, %s120
      %p129 = scmp.eq.s32.totalorder %s25, 0
      %p130 = por %p128, %p129
      %p131 = scmp.ne.s32.totalorder %s119, %s120
      %p132 = scmp.eq.s32.totalorder %s26, 1
      %p133 = por %p131, %p132
      %p135 = scmp.ne.s32.totalorder %s120, %s134
      %p136 = scmp.eq.s32.totalorder %s26, 0
      %p137 = por %p135, %p136
      %s139 = sadd.s32 %s138, 1
      %p142 = scmp.eq.s32.totalorder %s20, 1
      %p143 = scmp.ne.s32.totalorder %s138, %s140
      %p144 = scmp.eq.s32.totalorder %s20, 0
      %p145 = por %p143, %p144
      %p146 = scmp.ne.s32.totalorder %s138, %s140
      %p147 = scmp.eq.s32.totalorder %s25, 1
      %p148 = por %p146, %p147
      %p149 = scmp.ne.s32.totalorder %s140, %s141
      %p150 = scmp.eq.s32.totalorder %s25, 0
      %p151 = por %p149, %p150
      %p152 = scmp.ne.s32.totalorder %s140, %s141
      %p153 = scmp.eq.s32.totalorder %s26, 1
      %p154 = por %p152, %p153
      %p156 = scmp.ne.s32.totalorder %s141, %s155
      %p157 = scmp.eq.s32.totalorder %s26, 0
      %p158 = por %p156, %p157
      %s160 = sadd.s32 %s159, 1
      %p163 = scmp.eq.s32.totalorder %s20, 1
      %p164 = scmp.ne.s32.totalorder %s159, %s161
      %p165 = scmp.eq.s32.totalorder %s20, 0
      %p166 = por %p164, %p165
      %p167 = scmp.ne.s32.totalorder %s159, %s161
      %p168 = scmp.eq.s32.totalorder %s25, 1
      %p169 = por %p167, %p168
      %p170 = scmp.ne.s32.totalorder %s161, %s162
      %p171 = scmp.eq.s32.totalorder %s25, 0
      %p172 = por %p170, %p171
      %p173 = scmp.ne.s32.totalorder %s161, %s162
      %p174 = scmp.eq.s32.totalorder %s26, 1
      %p175 = por %p173, %p174
      %p177 = scmp.ne.s32.totalorder %s162, %s176
      %p178 = scmp.eq.s32.totalorder %s26, 0
      %p179 = por %p177, %p178
      %s180 = ssub.s32 %s20, %s27
      %p181 = scmp.eq.s32.totalorder %s180, 0
      %s183 = sadd.s32 %s182, 1
      %s184 = scalar_select %p181, %s182, %s183
      %p187 = pneg %p181
      %p188 = scmp.eq.s32.totalorder %s20, 1
      %p189 = por %p187, %p188
      %p190 = scmp.ne.s32.totalorder %s182, %s185
      %p191 = scmp.eq.s32.totalorder %s20, 0
      %p192 = por %p190, %p191
      %p193 = scmp.ne.s32.totalorder %s182, %s185
      %p194 = scmp.eq.s32.totalorder %s25, 1
      %p195 = por %p193, %p194
      %p196 = scmp.ne.s32.totalorder %s185, %s186
      %p197 = scmp.eq.s32.totalorder %s25, 0
      %p198 = por %p196, %p197
      %p199 = scmp.ne.s32.totalorder %s185, %s186
      %p200 = scmp.eq.s32.totalorder %s26, 1
      %p201 = por %p199, %p200
      %p203 = scmp.ne.s32.totalorder %s186, %s202
      %p204 = scmp.eq.s32.totalorder %s26, 0
      %p205 = por %p203, %p204
      %p206 = scmp.le.s32.totalorder 1, %s20
      %p207 = scmp.lt.s32.totalorder %s20, 3
      %p208 = pnand %p206, %p207
      %p209 = pneg %p208
      // Predicated region
      $region9: #{decoder_classification_forward.1} parent=5 // pred_check
        _
      $region10: #{decoder_classification_forward.1} parent=5 // pred_check_branch
        %211 = sbr.rel (%p208) target = $region12
      $region11: #{decoder_classification_forward.1} parent=5 // pred_region
        %s212 = ssub.s32 %s20, 1
        // Predicated region
        $region13: #{decoder_classification_forward.1} parent=11 // pred_check
          %p213 = pneg %p67
        $region14: #{decoder_classification_forward.1} parent=11 // pred_check_branch
          %215 = sbr.rel (%p213) target = $region16
        $region15: #{decoder_classification_forward.1} parent=11 // pred_region
          _
        $region16: #{decoder_classification_forward.1} parent=11 // pred_fallthru
          _
        // Predicated region
        $region17: #{decoder_classification_forward.1} parent=11 // pred_check
          %p216 = pneg %p88
        $region18: #{decoder_classification_forward.1} parent=11 // pred_check_branch
          %218 = sbr.rel (%p216) target = $region20
        $region19: #{decoder_classification_forward.1} parent=11 // pred_region
          _
        $region20: #{decoder_classification_forward.1} parent=11 // pred_fallthru
          _
        // Predicated region
        $region21: #{decoder_classification_forward.1} parent=11 // pred_check
          %p219 = pneg %p109
        $region22: #{decoder_classification_forward.1} parent=11 // pred_check_branch
          %221 = sbr.rel (%p219) target = $region24
        $region23: #{decoder_classification_forward.1} parent=11 // pred_region
          _
        $region24: #{decoder_classification_forward.1} parent=11 // pred_fallthru
          _
        // Predicated region
        $region25: #{decoder_classification_forward.1} parent=11 // pred_check
          %p222 = pneg %p130
        $region26: #{decoder_classification_forward.1} parent=11 // pred_check_branch
          %224 = sbr.rel (%p222) target = $region28
        $region27: #{decoder_classification_forward.1} parent=11 // pred_region
          _
        $region28: #{decoder_classification_forward.1} parent=11 // pred_fallthru
          _
        // Predicated region
        $region29: #{decoder_classification_forward.1} parent=11 // pred_check
          %p225 = pneg %p151
        $region30: #{decoder_classification_forward.1} parent=11 // pred_check_branch
          %227 = sbr.rel (%p225) target = $region32
        $region31: #{decoder_classification_forward.1} parent=11 // pred_region
          %s229 = ssub.s32 8192, 8192
          %230 = vsyncadd [#allocation11], %s229
          %s231 = sshll.u32 [#allocation10], 4
          %s232 = int_to_ptr.vmem [resolvable:$true] %s231
          %237 = dma.hbm_to_vmem [thread:$0]  %s5, 8192, %s232, [#allocation11], 256, 256, 16
        $region32: #{decoder_classification_forward.1} parent=11 // pred_fallthru
          _
        // Predicated region
        $region33: #{decoder_classification_forward.1} parent=11 // pred_check
          %p238 = pneg %p172
        $region34: #{decoder_classification_forward.1} parent=11 // pred_check_branch
          %240 = sbr.rel (%p238) target = $region36
        $region35: #{decoder_classification_forward.1} parent=11 // pred_region
          _
        $region36: #{decoder_classification_forward.1} parent=11 // pred_fallthru
          _
      $region12: #{decoder_classification_forward.1} parent=5 // pred_fallthru
        _
      %p241 = scmp.lt.s32.totalorder %s20, 2
      // Predicated region
      $region37: #{decoder_classification_forward.1} parent=5 // pred_check
        %p242 = pneg %p241
      $region38: #{decoder_classification_forward.1} parent=5 // pred_check_branch
        %244 = sbr.rel (%p242) target = $region40
      $region39: #{decoder_classification_forward.1} parent=5 // pred_region
        // Predicated region
        $region41: #{decoder_classification_forward.1} parent=39 // pred_check
          %p245 = pneg %p40
        $region42: #{decoder_classification_forward.1} parent=39 // pred_check_branch
          %247 = sbr.rel (%p245) target = $region44
        $region43: #{decoder_classification_forward.1} parent=39 // pred_region
          %s248 = sand.u32 %s30, 1
          %s249 = scalar_lea.sflag [#allocation8], %s248
          %s250 = sand.u32 %s30, 1
          %s251 = smul.addr %s250, 64
          %s252 = scalar_lea.vmem [#allocation7], %s251
          %s254 = ssub.s32 1024, 1024
          %255 = vsyncadd %s249, %s254
          %s256 = smul.addr %s20, 8
          %s257 = smul.addr %s256, 128
          %s258 = scalar_lea.hbm %s0, %s257
          %s259 = sshll.u32 %s252, 4
          %s260 = int_to_ptr.vmem [resolvable:$true] %s259
          %265 = dma.hbm_to_vmem [thread:$0]  %s258, 1024, %s260, %s249, 128, 128, 8
        $region44: #{decoder_classification_forward.1} parent=39 // pred_fallthru
          _
      $region40: #{decoder_classification_forward.1} parent=5 // pred_fallthru
        _
      %p266 = scmp.le.s32.totalorder 1, %s20
      %p267 = scmp.lt.s32.totalorder %s20, 3
      %p268 = pnand %p266, %p267
      %p269 = pneg %p268
      // Predicated region
      $region45: #{decoder_classification_forward.1} parent=5 // pred_check
        _
      $region46: #{decoder_classification_forward.1} parent=5 // pred_check_branch
        %271 = sbr.rel (%p268) target = $region48
      $region47: #{decoder_classification_forward.1} parent=5 // pred_region
        %s272 = ssub.s32 %s20, 1
        %s273 = sand.u32 %s33, 1
        %s274 = scalar_lea.sflag [#allocation8], %s273
        %s275 = sand.u32 %s33, 1
        %s276 = smul.addr %s275, 64
        %s277 = scalar_lea.vmem [#allocation7], %s276
        // Predicated region
        $region49: #{decoder_classification_forward.1} parent=47 // pred_check
          %p278 = pneg %p46
        $region50: #{decoder_classification_forward.1} parent=47 // pred_check_branch
          %280 = sbr.rel (%p278) target = $region52
        $region51: #{decoder_classification_forward.1} parent=47 // pred_region
          %281 = dma.done %s274, 1024
        $region52: #{decoder_classification_forward.1} parent=47 // pred_fallthru
          _
        // Predicated region
        $region53: #{decoder_classification_forward.1} parent=47 // pred_check
          %p282 = pneg %p151
        $region54: #{decoder_classification_forward.1} parent=47 // pred_check_branch
          %284 = sbr.rel (%p282) target = $region56
        $region55: #{decoder_classification_forward.1} parent=47 // pred_region
          %285 = dma.done [#allocation11], 8192
        $region56: #{decoder_classification_forward.1} parent=47 // pred_fallthru
          _
        %s286 = sand.u32 %s33, 1
        %s287 = scalar_lea.sflag [#allocation8], %s286
        %s288 = sand.u32 %s33, 1
        %s289 = smul.addr %s288, 64
        %s290 = scalar_lea.vmem [#allocation7], %s289
        %p291 = pneg %p46
        %p292 = pneg %p43
        %p293 = pneg %p67
        %p294 = pneg %p64
        %p295 = pneg %p88
        %p296 = pneg %p85
        %p297 = pneg %p109
        %p298 = pneg %p106
        %p299 = pneg %p130
        %p300 = pneg %p127
        %p301 = pneg %p151
        %p302 = pneg %p148
        %p303 = pneg %p172
        %p304 = pneg %p169
        %p305 = pneg %p198
        %p306 = pneg %p195
        %s307 = sand.u32 %s185, 1
        %s308 = scalar_lea.sflag [#allocation9], %s307
        %s309 = sand.u32 %s185, 1
        %s310 = smul.addr %s309, 4
        %s311 = scalar_lea.vmem [#allocation12], %s310
        %313 = vst [vmem:[#allocation2] sm:$0xff] 0
        %314 = vst [vmem:[#allocation2 + $0x8] sm:$0xff] 0
        %315 = vst [vmem:[#allocation2 + $0x10] sm:$0xff] 0
        %316 = vst [vmem:[#allocation2 + $0x18] sm:$0xff] 0
        %317 = vst [vmem:[#allocation2 + $0x20] sm:$0xff] 0
        %318 = vst [vmem:[#allocation2 + $0x28] sm:$0xff] 0
        %319 = vst [vmem:[#allocation2 + $0x30] sm:$0xff] 0
        %320 = vst [vmem:[#allocation2 + $0x38] sm:$0xff] 0
        %321 = vst [vmem:[#allocation4] sm:$0xff] 0
        %322 = vst [vmem:[#allocation4 + $0x8] sm:$0xff] 0
        %323 = vst [vmem:[#allocation4 + $0x10] sm:$0xff] 0
        %324 = vst [vmem:[#allocation4 + $0x18] sm:$0xff] 0
        %v325 = vld [vmem:[%s277] sm:$0xff]
        %v326 = vld [vmem:[%s277 + $0x8] sm:$0xff]
        %v327 = vld [vmem:[%s277 + $0x10] sm:$0xff]
        %v328 = vld [vmem:[%s277 + $0x18] sm:$0xff]
        %v329 = vld [vmem:[%s277 + $0x20] sm:$0xff]
        %v330 = vld [vmem:[%s277 + $0x28] sm:$0xff]
        %v331 = vld [vmem:[%s277 + $0x30] sm:$0xff]
        %v332 = vld [vmem:[%s277 + $0x38] sm:$0xff]
        %v333 = vpack.c.bf16 %v326, %v325
        %v334 = vpack.c.bf16 %v328, %v327
        %v335 = vpack.c.bf16 %v330, %v329
        %v336 = vpack.c.bf16 %v332, %v331
        %341 = vrot.lane.b32.xlu0 %v333, 1
        %v342 = vpop.permute.xlu0 %341
        %343 = vrot.lane.b32.xlu0 %v334, 1
        %v344 = vpop.permute.xlu0 %343
        %345 = vrot.lane.b32.xlu0 %v335, 1
        %v346 = vpop.permute.xlu0 %345
        %347 = vrot.lane.b32.xlu0 %v336, 1
        %v348 = vpop.permute.xlu0 %347
        %vm353 = vcmask 1006600
        %354 = vst.msk [vmem:[#allocation2] sm:$0xff] %vm353, %v342
        %355 = vst.msk [vmem:[#allocation2 + $0x10] sm:$0xff] %vm353, %v344
        %356 = vst.msk [vmem:[#allocation2 + $0x20] sm:$0xff] %vm353, %v346
        %357 = vst.msk [vmem:[#allocation2 + $0x30] sm:$0xff] %vm353, %v348
        %v358 = vld [vmem:[#allocation2] sm:$0xff]
        %v359 = vld [vmem:[#allocation2 + $0x10] sm:$0xff]
        %v360 = vld [vmem:[#allocation2 + $0x20] sm:$0xff]
        %v361 = vld [vmem:[#allocation2 + $0x30] sm:$0xff]
        %362 = vst [vmem:[#allocation3] sm:$0xff] %v358
        %363 = vst [vmem:[#allocation3 + $0x8] sm:$0xff] %v359
        %364 = vst [vmem:[#allocation3 + $0x10] sm:$0xff] %v360
        %365 = vst [vmem:[#allocation3 + $0x18] sm:$0xff] %v361
        %v366 = vld [vmem:[#allocation2] sm:$0xff]
        %v367 = vld [vmem:[#allocation2 + $0x8] sm:$0xff]
        %v368 = vld [vmem:[#allocation2 + $0x10] sm:$0xff]
        %v369 = vld [vmem:[#allocation2 + $0x18] sm:$0xff]
        %v370 = vld [vmem:[#allocation2 + $0x20] sm:$0xff]
        %v371 = vld [vmem:[#allocation2 + $0x28] sm:$0xff]
        %v372 = vld [vmem:[#allocation2 + $0x30] sm:$0xff]
        %v373 = vld [vmem:[#allocation2 + $0x38] sm:$0xff]
        %382 = vrot.lane.b32.xlu0 %v366, 127
        %v383 = vpop.permute.xlu0 %382
        %384 = vrot.lane.b32.xlu0 %v367, 127
        %v385 = vpop.permute.xlu0 %384
        %386 = vrot.lane.b32.xlu0 %v368, 127
        %v387 = vpop.permute.xlu0 %386
        %388 = vrot.lane.b32.xlu0 %v369, 127
        %v389 = vpop.permute.xlu0 %388
        %390 = vrot.lane.b32.xlu0 %v370, 127
        %v391 = vpop.permute.xlu0 %390
        %392 = vrot.lane.b32.xlu0 %v371, 127
        %v393 = vpop.permute.xlu0 %392
        %394 = vrot.lane.b32.xlu0 %v372, 127
        %v395 = vpop.permute.xlu0 %394
        %396 = vrot.lane.b32.xlu0 %v373, 127
        %v397 = vpop.permute.xlu0 %396
        %vm398 = vcmask 1039360
        %v399 = vsel %vm398, %v383, %v385
        %v400 = vsel %vm398, %v387, %v389
        %v401 = vsel %vm398, %v391, %v393
        %v402 = vsel %vm398, %v395, %v397
        %407 = vst [vmem:[#allocation3 + $0x20] sm:$0xff] %v399
        %408 = vst [vmem:[#allocation3 + $0x28] sm:$0xff] %v400
        %409 = vst [vmem:[#allocation3 + $0x30] sm:$0xff] %v401
        %410 = vst [vmem:[#allocation3 + $0x38] sm:$0xff] %v402
        %v411 = vld [vmem:[#allocation2] sm:$0xff]
        %v412 = vld [vmem:[#allocation2 + $0x8] sm:$0xff]
        %v413 = vld [vmem:[#allocation2 + $0x10] sm:$0xff]
        %v414 = vld [vmem:[#allocation2 + $0x18] sm:$0xff]
        %v415 = vld [vmem:[#allocation2 + $0x20] sm:$0xff]
        %v416 = vld [vmem:[#allocation2 + $0x28] sm:$0xff]
        %v417 = vld [vmem:[#allocation2 + $0x30] sm:$0xff]
        %v418 = vld [vmem:[#allocation2 + $0x38] sm:$0xff]
        %427 = vrot.lane.b32.xlu0 %v411, 126
        %v428 = vpop.permute.xlu0 %427
        %429 = vrot.lane.b32.xlu0 %v412, 126
        %v430 = vpop.permute.xlu0 %429
        %431 = vrot.lane.b32.xlu0 %v413, 126
        %v432 = vpop.permute.xlu0 %431
        %433 = vrot.lane.b32.xlu0 %v414, 126
        %v434 = vpop.permute.xlu0 %433
        %435 = vrot.lane.b32.xlu0 %v415, 126
        %v436 = vpop.permute.xlu0 %435
        %437 = vrot.lane.b32.xlu0 %v416, 126
        %v438 = vpop.permute.xlu0 %437
        %439 = vrot.lane.b32.xlu0 %v417, 126
        %v440 = vpop.permute.xlu0 %439
        %441 = vrot.lane.b32.xlu0 %v418, 126
        %v442 = vpop.permute.xlu0 %441
        %vm443 = vcmask 1031168
        %v444 = vsel %vm443, %v428, %v430
        %v445 = vsel %vm443, %v432, %v434
        %v446 = vsel %vm443, %v436, %v438
        %v447 = vsel %vm443, %v440, %v442
        %452 = vst [vmem:[#allocation3 + $0x40] sm:$0xff] %v444
        %453 = vst [vmem:[#allocation3 + $0x48] sm:$0xff] %v445
        %454 = vst [vmem:[#allocation3 + $0x50] sm:$0xff] %v446
        %455 = vst [vmem:[#allocation3 + $0x58] sm:$0xff] %v447
        %v456 = vld [vmem:[%s1] sm:$0xff]
        %v457 = vld [vmem:[%s1 + $0x8] sm:$0xff]
        %v458 = vld [vmem:[%s1 + $0x10] sm:$0xff]
        %v459 = vld [vmem:[%s1 + $0x18] sm:$0xff]
        %v460 = vld [vmem:[#allocation3] sm:$0xff]
        %v461 = vld [vmem:[#allocation3 + $0x8] sm:$0xff]
        %v462 = vld [vmem:[#allocation3 + $0x10] sm:$0xff]
        %v463 = vld [vmem:[#allocation3 + $0x18] sm:$0xff]
        %v464 = vld [vmem:[#allocation3 + $0x20] sm:$0xff]
        %v465 = vld [vmem:[#allocation3 + $0x28] sm:$0xff]
        %v466 = vld [vmem:[#allocation3 + $0x30] sm:$0xff]
        %v467 = vld [vmem:[#allocation3 + $0x38] sm:$0xff]
        %v468 = vld [vmem:[#allocation3 + $0x40] sm:$0xff]
        %v469 = vld [vmem:[#allocation3 + $0x48] sm:$0xff]
        %v470 = vld [vmem:[#allocation3 + $0x50] sm:$0xff]
        %v471 = vld [vmem:[#allocation3 + $0x58] sm:$0xff]
        %v472 = vld [vmem:[%s2] sm:$0xff]
        %v473 = vld [vmem:[%s2 + $0x8] sm:$0xff]
        %v474 = vld [vmem:[%s2 + $0x10] sm:$0xff]
        %v475 = vld [vmem:[%s2 + $0x18] sm:$0xff]
        %477 = vset.pattern.permute.xlu0 0
        %478 = vperm.xlu0 %477, %v472
        %v479 = vpop.permute.xlu0 %478
        %482 = vset.pattern.permute.xlu0 0
        %483 = vperm.xlu0 %482, %v473
        %v484 = vpop.permute.xlu0 %483
        %487 = vset.pattern.permute.xlu0 0
        %488 = vperm.xlu0 %487, %v474
        %v489 = vpop.permute.xlu0 %488
        %492 = vset.pattern.permute.xlu0 0
        %493 = vperm.xlu0 %492, %v475
        %v494 = vpop.permute.xlu0 %493
        %v500 = vunpack.c.l.b16 %v456
        %v501 = vunpack.c.h.b16 %v456
        %v502 = vunpack.c.l.b16 %v457
        %v503 = vunpack.c.h.b16 %v457
        %v504 = vunpack.c.l.b16 %v458
        %v505 = vunpack.c.h.b16 %v458
        %v506 = vunpack.c.l.b16 %v459
        %v507 = vunpack.c.h.b16 %v459
        %v508 = vpack.c.b16 %v502, %v500
        %v509 = vpack.c.b16 %v503, %v501
        %v510 = vpack.c.b16 %v506, %v504
        %v511 = vpack.c.b16 %v507, %v505
        %vm514 = vcmask 523264
        %v516 = vsel %vm514, %v509, 0
        %v519 = vsel %vm514, %v511, 0
        %521 = vmatprep.subr.bf16.mxu0 0
        %522 = vmatpush1.bf16.msra.mxu0 %v460
        %523 = vmatprep.subr.bf16.mxu0 0
        %524 = vmatpush1.bf16.msra.mxu0 %v461
        %525 = vmatprep.subr.bf16.mxu0 0
        %526 = vmatpush1.bf16.msra.mxu0 %v462
        %527 = vmatprep.subr.bf16.mxu0 0
        %528 = vmatpush1.bf16.msra.mxu0 %v463
        %529 = vmatprep.subr.bf16.mxu0 0
        %530 = vmatpush1.bf16.msra.mxu0 %v464
        %531 = vmatprep.subr.bf16.mxu0 0
        %532 = vmatpush1.bf16.msra.mxu0 %v465
        %533 = vmatprep.subr.bf16.mxu0 0
        %534 = vmatpush1.bf16.msra.mxu0 %v466
        %535 = vmatprep.subr.bf16.mxu0 0
        %536 = vmatpush1.bf16.msra.mxu0 %v467
        %537 = vmatprep.subr.bf16.mxu0 0
        %538 = vmatpush1.bf16.msra.mxu0 %v468
        %539 = vmatprep.subr.bf16.mxu0 0
        %540 = vmatpush1.bf16.msra.mxu0 %v469
        %541 = vmatprep.subr.bf16.mxu0 0
        %542 = vmatpush1.bf16.msra.mxu0 %v470
        %543 = vmatprep.subr.bf16.mxu0 0
        %544 = vmatpush1.bf16.msra.mxu0 %v471
        %545 = vmatprep.subr.bf16.mxu0 0
        %546 = vmatpush1.bf16.msra.mxu0 0
        %547 = vmatprep.subr.bf16.mxu0 0
        %548 = vmatpush1.bf16.msra.mxu0 0
        %549 = vmatprep.subr.bf16.mxu0 0
        %550 = vmatpush1.bf16.msra.mxu0 0
        %551 = vmatprep.subr.bf16.mxu0 0
        %552 = vmatpush1.bf16.msra.mxu0 0
        %553 = vmatprep.mubr.bf16.mxu0 %v516
        %554 = vmatmul.mubr.bf16.gmra.mrb[0].mxu0 %v508
        %v555 = vpop.f32.mrb[0].mxu0
        %v556 = vadd.f32 %v479, %v555
        %v557 = vpop.f32.mrb[0].mxu0
        %v558 = vpop.f32.mrb[0].mxu0
        %v559 = vadd.f32 %v484, %v558
        %v560 = vpop.f32.mrb[0].mxu0
        %561 = vmatprep.mubr.bf16.mxu0 %v519
        %562 = vmatmul.mubr.bf16.gmra.mrb[0].mxu0 %v510
        %v563 = vpop.f32.mrb[0].mxu0
        %v564 = vadd.f32 %v489, %v563
        %v565 = vpop.f32.mrb[0].mxu0
        %v566 = vpop.f32.mrb[0].mxu0
        %v567 = vadd.f32 %v494, %v566
        %v568 = vpop.f32.mrb[0].mxu0
        %569 = vdwg.mxu0
        %v570 = vmax.f32 %v556, 0.0
        %v571 = vmax.f32 %v559, 0.0
        %v572 = vmax.f32 %v564, 0.0
        %v573 = vmax.f32 %v567, 0.0
        %v574 = vpack.c.bf16 %v571, %v570
        %v575 = vpack.c.bf16 %v573, %v572
        %578 = vrot.lane.b32.xlu0 %v574, 1
        %v579 = vpop.permute.xlu0 %578
        %580 = vrot.lane.b32.xlu0 %v575, 1
        %v581 = vpop.permute.xlu0 %580
        %584 = vst.msk [vmem:[#allocation4] sm:$0xff] %vm353, %v579
        %585 = vst.msk [vmem:[#allocation4 + $0x10] sm:$0xff] %vm353, %v581
        %v586 = vld [vmem:[#allocation4] sm:$0xff]
        %v587 = vld [vmem:[#allocation4 + $0x10] sm:$0xff]
        %588 = vst [vmem:[#allocation5] sm:$0xff] %v586
        %589 = vst [vmem:[#allocation5 + $0x8] sm:$0xff] %v587
        %v590 = vld [vmem:[#allocation4] sm:$0xff]
        %v591 = vld [vmem:[#allocation4 + $0x8] sm:$0xff]
        %v592 = vld [vmem:[#allocation4 + $0x10] sm:$0xff]
        %v593 = vld [vmem:[#allocation4 + $0x18] sm:$0xff]
        %598 = vrot.lane.b32.xlu0 %v590, 127
        %v599 = vpop.permute.xlu0 %598
        %600 = vrot.lane.b32.xlu0 %v591, 127
        %v601 = vpop.permute.xlu0 %600
        %602 = vrot.lane.b32.xlu0 %v592, 127
        %v603 = vpop.permute.xlu0 %602
        %604 = vrot.lane.b32.xlu0 %v593, 127
        %v605 = vpop.permute.xlu0 %604
        %v606 = vsel %vm398, %v599, %v601
        %v607 = vsel %vm398, %v603, %v605
        %610 = vst [vmem:[#allocation5 + $0x10] sm:$0xff] %v606
        %611 = vst [vmem:[#allocation5 + $0x18] sm:$0xff] %v607
        %v612 = vld [vmem:[#allocation4] sm:$0xff]
        %v613 = vld [vmem:[#allocation4 + $0x8] sm:$0xff]
        %v614 = vld [vmem:[#allocation4 + $0x10] sm:$0xff]
        %v615 = vld [vmem:[#allocation4 + $0x18] sm:$0xff]
        %620 = vrot.lane.b32.xlu0 %v612, 126
        %v621 = vpop.permute.xlu0 %620
        %622 = vrot.lane.b32.xlu0 %v613, 126
        %v623 = vpop.permute.xlu0 %622
        %624 = vrot.lane.b32.xlu0 %v614, 126
        %v625 = vpop.permute.xlu0 %624
        %626 = vrot.lane.b32.xlu0 %v615, 126
        %v627 = vpop.permute.xlu0 %626
        %v628 = vsel %vm443, %v621, %v623
        %v629 = vsel %vm443, %v625, %v627
        %632 = vst [vmem:[#allocation5 + $0x20] sm:$0xff] %v628
        %633 = vst [vmem:[#allocation5 + $0x28] sm:$0xff] %v629
        %v634 = vld [vmem:[#allocation4] sm:$0xff]
        %v635 = vld [vmem:[#allocation4 + $0x8] sm:$0xff]
        %v636 = vld [vmem:[#allocation4 + $0x10] sm:$0xff]
        %v637 = vld [vmem:[#allocation4 + $0x18] sm:$0xff]
        %642 = vrot.lane.b32.xlu0 %v634, 125
        %v643 = vpop.permute.xlu0 %642
        %644 = vrot.lane.b32.xlu0 %v635, 125
        %v645 = vpop.permute.xlu0 %644
        %646 = vrot.lane.b32.xlu0 %v636, 125
        %v647 = vpop.permute.xlu0 %646
        %648 = vrot.lane.b32.xlu0 %v637, 125
        %v649 = vpop.permute.xlu0 %648
        %vm650 = vcmask 1022976
        %v651 = vsel %vm650, %v643, %v645
        %v652 = vsel %vm650, %v647, %v649
        %655 = vst [vmem:[#allocation5 + $0x30] sm:$0xff] %v651
        %656 = vst [vmem:[#allocation5 + $0x38] sm:$0xff] %v652
        %v657 = vld [vmem:[%s3] sm:$0x1]
        %v658 = vld [vmem:[#allocation5] sm:$0xff]
        %v659 = vld [vmem:[#allocation5 + $0x8] sm:$0xff]
        %v660 = vld [vmem:[#allocation5 + $0x10] sm:$0xff]
        %v661 = vld [vmem:[#allocation5 + $0x18] sm:$0xff]
        %v662 = vld [vmem:[#allocation5 + $0x20] sm:$0xff]
        %v663 = vld [vmem:[#allocation5 + $0x28] sm:$0xff]
        %v664 = vld [vmem:[#allocation5 + $0x30] sm:$0xff]
        %v665 = vld [vmem:[#allocation5 + $0x38] sm:$0xff]
        %v666 = vld [vmem:[%s4] sm:$0x3]
        %668 = vset.pattern.permute.xlu0 0
        %669 = vperm.xlu0 %668, %v666
        %v670 = vpop.permute.xlu0 %669
        %672 = vmatprep.subr.bf16.mxu0 0
        %673 = vmatpush1.bf16.msra.mxu0 %v658
        %674 = vmatprep.subr.bf16.mxu0 0
        %675 = vmatpush1.bf16.msra.mxu0 %v659
        %676 = vmatprep.subr.bf16.mxu0 0
        %677 = vmatpush1.bf16.msra.mxu0 %v660
        %678 = vmatprep.subr.bf16.mxu0 0
        %679 = vmatpush1.bf16.msra.mxu0 %v661
        %680 = vmatprep.subr.bf16.mxu0 0
        %681 = vmatpush1.bf16.msra.mxu0 %v662
        %682 = vmatprep.subr.bf16.mxu0 0
        %683 = vmatpush1.bf16.msra.mxu0 %v663
        %684 = vmatprep.subr.bf16.mxu0 0
        %685 = vmatpush1.bf16.msra.mxu0 %v664
        %686 = vmatprep.subr.bf16.mxu0 0
        %687 = vmatpush1.bf16.msra.mxu0 %v665
        %688 = vmatprep.subr.bf16.mxu0 0
        %689 = vmatpush1.bf16.msra.mxu0 0
        %690 = vmatprep.subr.bf16.mxu0 0
        %691 = vmatpush1.bf16.msra.mxu0 0
        %692 = vmatprep.subr.bf16.mxu0 0
        %693 = vmatpush1.bf16.msra.mxu0 0
        %694 = vmatprep.subr.bf16.mxu0 0
        %695 = vmatpush1.bf16.msra.mxu0 0
        %696 = vmatprep.subr.bf16.mxu0 0
        %697 = vmatpush1.bf16.msra.mxu0 0
        %698 = vmatprep.subr.bf16.mxu0 0
        %699 = vmatpush1.bf16.msra.mxu0 0
        %700 = vmatprep.subr.bf16.mxu0 0
        %701 = vmatpush1.bf16.msra.mxu0 0
        %702 = vmatprep.subr.bf16.mxu0 0
        %703 = vmatpush1.bf16.msra.mxu0 0
        %704 = vmatprep.mubr.bf16.mxu0 0
        %705 = vmatmul.mubr.bf16.gmra.mrb[0].mxu0 %v657
        %v706 = vpop.f32.mrb[0].mxu0
        %v707 = vadd.f32 %v670, %v706
        %v708 = vpop.f32.mrb[0].mxu0
        %v709 = vpop.f32.mrb[0].mxu0
        %v710 = vpop.f32.mrb[0].mxu0
        %711 = vdwg.mxu0
        %v712 = vmax.f32 %v707, 0.0
        %v713 = vpack.c.bf16 %v712, %v712
        %vm714 = vcmask 1040384
        %vm715 = vsmask.f32 256
        %vm716 = vmand %vm714, %vm715
        %v717 = vld [vmem:[#allocation6] sm:$0x1]
        %v718 = vsel %vm716, %v713, %v717
        %719 = vst [vmem:[#allocation6] sm:$0x1] %v718
        %v722 = vunpack.c.l.s4 1966171168
        %v723 = vunpack.c.0.s8 %v722
        %v724 = vlaneseq
        %v725 = vshrl.u32 %v724, 7
        %v726 = vsub.s32 %v723, %v725
        %v727 = vrot.slane %v713, %v726
        %v729 = vunpack.c.l.s4 1966171168
        %v730 = vunpack.c.0.s8 %v729
        %v731 = vlaneseq
        %v732 = vshrl.u32 %v731, 7
        %v733 = vsub.s32 %v730, %v732
        %v734 = vrot.slane %v727, %v733
        %v736 = vshrl.u32 %v734, 16
        %v738 = vrot.slane %v736, 7
        %v739 = vrot.slane %v738, 1
        %v741 = vld [vmem:[#allocation6 + $0x1] sm:$0x1]
        %v742 = vsel %vm716, %v739, %v741
        %743 = vst [vmem:[#allocation6 + $0x1] sm:$0x1] %v742
        %v744 = vld [vmem:[#allocation6] sm:$0x3]
        %v745 = vld [vmem:[#allocation10] sm:$0xff]
        %v746 = vld [vmem:[#allocation10 + $0x8] sm:$0xff]
        %v747 = vld [vmem:[#allocation10 + $0x10] sm:$0xff]
        %v748 = vld [vmem:[#allocation10 + $0x18] sm:$0xff]
        %v749 = vld [vmem:[#allocation10 + $0x20] sm:$0xff]
        %v750 = vld [vmem:[#allocation10 + $0x28] sm:$0xff]
        %v751 = vld [vmem:[#allocation10 + $0x30] sm:$0xff]
        %v752 = vld [vmem:[#allocation10 + $0x38] sm:$0xff]
        %v753 = vld [vmem:[#allocation10 + $0x40] sm:$0xff]
        %v754 = vld [vmem:[#allocation10 + $0x48] sm:$0xff]
        %v755 = vld [vmem:[#allocation10 + $0x50] sm:$0xff]
        %v756 = vld [vmem:[#allocation10 + $0x58] sm:$0xff]
        %v757 = vld [vmem:[#allocation10 + $0x60] sm:$0xff]
        %v758 = vld [vmem:[#allocation10 + $0x68] sm:$0xff]
        %v759 = vld [vmem:[#allocation10 + $0x70] sm:$0xff]
        %v760 = vld [vmem:[#allocation10 + $0x78] sm:$0xff]
        %v761 = vld [vmem:[#allocation10 + $0x80] sm:$0xff]
        %v762 = vld [vmem:[#allocation10 + $0x88] sm:$0xff]
        %v763 = vld [vmem:[#allocation10 + $0x90] sm:$0xff]
        %v764 = vld [vmem:[#allocation10 + $0x98] sm:$0xff]
        %v765 = vld [vmem:[#allocation10 + $0xa0] sm:$0xff]
        %v766 = vld [vmem:[#allocation10 + $0xa8] sm:$0xff]
        %v767 = vld [vmem:[#allocation10 + $0xb0] sm:$0xff]
        %v768 = vld [vmem:[#allocation10 + $0xb8] sm:$0xff]
        %v769 = vld [vmem:[#allocation10 + $0xc0] sm:$0xff]
        %v770 = vld [vmem:[#allocation10 + $0xc8] sm:$0xff]
        %v771 = vld [vmem:[#allocation10 + $0xd0] sm:$0xff]
        %v772 = vld [vmem:[#allocation10 + $0xd8] sm:$0xff]
        %v773 = vld [vmem:[#allocation10 + $0xe0] sm:$0xff]
        %v774 = vld [vmem:[#allocation10 + $0xe8] sm:$0xff]
        %v775 = vld [vmem:[#allocation10 + $0xf0] sm:$0xff]
        %v776 = vld [vmem:[#allocation10 + $0xf8] sm:$0xff]
        %v777 = vld [vmem:[#allocation10 + $0x100] sm:$0xff]
        %v778 = vld [vmem:[#allocation10 + $0x108] sm:$0xff]
        %v779 = vld [vmem:[#allocation10 + $0x110] sm:$0xff]
        %v780 = vld [vmem:[#allocation10 + $0x118] sm:$0xff]
        %v781 = vld [vmem:[#allocation10 + $0x120] sm:$0xff]
        %v782 = vld [vmem:[#allocation10 + $0x128] sm:$0xff]
        %v783 = vld [vmem:[#allocation10 + $0x130] sm:$0xff]
        %v784 = vld [vmem:[#allocation10 + $0x138] sm:$0xff]
        %v785 = vld [vmem:[#allocation10 + $0x140] sm:$0xff]
        %v786 = vld [vmem:[#allocation10 + $0x148] sm:$0xff]
        %v787 = vld [vmem:[#allocation10 + $0x150] sm:$0xff]
        %v788 = vld [vmem:[#allocation10 + $0x158] sm:$0xff]
        %v789 = vld [vmem:[#allocation10 + $0x160] sm:$0xff]
        %v790 = vld [vmem:[#allocation10 + $0x168] sm:$0xff]
        %v791 = vld [vmem:[#allocation10 + $0x170] sm:$0xff]
        %v792 = vld [vmem:[#allocation10 + $0x178] sm:$0xff]
        %v793 = vld [vmem:[#allocation10 + $0x180] sm:$0xff]
        %v794 = vld [vmem:[#allocation10 + $0x188] sm:$0xff]
        %v795 = vld [vmem:[#allocation10 + $0x190] sm:$0xff]
        %v796 = vld [vmem:[#allocation10 + $0x198] sm:$0xff]
        %v797 = vld [vmem:[#allocation10 + $0x1a0] sm:$0xff]
        %v798 = vld [vmem:[#allocation10 + $0x1a8] sm:$0xff]
        %v799 = vld [vmem:[#allocation10 + $0x1b0] sm:$0xff]
        %v800 = vld [vmem:[#allocation10 + $0x1b8] sm:$0xff]
        %v801 = vld [vmem:[#allocation10 + $0x1c0] sm:$0xff]
        %v802 = vld [vmem:[#allocation10 + $0x1c8] sm:$0xff]
        %v803 = vld [vmem:[#allocation10 + $0x1d0] sm:$0xff]
        %v804 = vld [vmem:[#allocation10 + $0x1d8] sm:$0xff]
        %v805 = vld [vmem:[#allocation10 + $0x1e0] sm:$0xff]
        %v806 = vld [vmem:[#allocation10 + $0x1e8] sm:$0xff]
        %v807 = vld [vmem:[#allocation10 + $0x1f0] sm:$0xff]
        %v808 = vld [vmem:[#allocation10 + $0x1f8] sm:$0xff]
        %v809 = vld [vmem:[%s6] sm:$0xf]
        %v812 = vunpack.c.l.s4 1966171168
        %v813 = vunpack.c.0.s8 %v812
        %v814 = vlaneseq
        %v815 = vshrl.u32 %v814, 7
        %v816 = vsub.s32 %v813, %v815
        %v817 = vrot.slane %v744, %v816
        %v818 = vcombine.high %v817, %v817
        %v820 = vunpack.c.l.s4 1966171168
        %v821 = vunpack.c.0.s8 %v820
        %v822 = vlaneseq
        %v823 = vshrl.u32 %v822, 7
        %v824 = vsub.s32 %v821, %v823
        %v825 = vrot.slane %v817, %v824
        %v827 = vunpack.c.l.s4 1966171168
        %v828 = vunpack.c.0.s8 %v827
        %v829 = vlaneseq
        %v830 = vshrl.u32 %v829, 7
        %v831 = vsub.s32 %v828, %v830
        %v832 = vrot.slane %v818, %v831
        %v899 = vunpack.c.l.b16 %v745
        %v900 = vunpack.c.h.b16 %v745
        %v901 = vunpack.c.l.b16 %v746
        %v902 = vunpack.c.h.b16 %v746
        %v903 = vunpack.c.l.b16 %v747
        %v904 = vunpack.c.h.b16 %v747
        %v905 = vunpack.c.l.b16 %v748
        %v906 = vunpack.c.h.b16 %v748
        %v907 = vunpack.c.l.b16 %v749
        %v908 = vunpack.c.h.b16 %v749
        %v909 = vunpack.c.l.b16 %v750
        %v910 = vunpack.c.h.b16 %v750
        %v911 = vunpack.c.l.b16 %v751
        %v912 = vunpack.c.h.b16 %v751
        %v913 = vunpack.c.l.b16 %v752
        %v914 = vunpack.c.h.b16 %v752
        %v915 = vunpack.c.l.b16 %v753
        %v916 = vunpack.c.h.b16 %v753
        %v917 = vunpack.c.l.b16 %v754
        %v918 = vunpack.c.h.b16 %v754
        %v919 = vunpack.c.l.b16 %v755
        %v920 = vunpack.c.h.b16 %v755
        %v921 = vunpack.c.l.b16 %v756
        %v922 = vunpack.c.h.b16 %v756
        %v923 = vunpack.c.l.b16 %v757
        %v924 = vunpack.c.h.b16 %v757
        %v925 = vunpack.c.l.b16 %v758
        %v926 = vunpack.c.h.b16 %v758
        %v927 = vunpack.c.l.b16 %v759
        %v928 = vunpack.c.h.b16 %v759
        %v929 = vunpack.c.l.b16 %v760
        %v930 = vunpack.c.h.b16 %v760
        %v931 = vunpack.c.l.b16 %v761
        %v932 = vunpack.c.h.b16 %v761
        %v933 = vunpack.c.l.b16 %v762
        %v934 = vunpack.c.h.b16 %v762
        %v935 = vunpack.c.l.b16 %v763
        %v936 = vunpack.c.h.b16 %v763
        %v937 = vunpack.c.l.b16 %v764
        %v938 = vunpack.c.h.b16 %v764
        %v939 = vunpack.c.l.b16 %v765
        %v940 = vunpack.c.h.b16 %v765
        %v941 = vunpack.c.l.b16 %v766
        %v942 = vunpack.c.h.b16 %v766
        %v943 = vunpack.c.l.b16 %v767
        %v944 = vunpack.c.h.b16 %v767
        %v945 = vunpack.c.l.b16 %v768
        %v946 = vunpack.c.h.b16 %v768
        %v947 = vunpack.c.l.b16 %v769
        %v948 = vunpack.c.h.b16 %v769
        %v949 = vunpack.c.l.b16 %v770
        %v950 = vunpack.c.h.b16 %v770
        %v951 = vunpack.c.l.b16 %v771
        %v952 = vunpack.c.h.b16 %v771
        %v953 = vunpack.c.l.b16 %v772
        %v954 = vunpack.c.h.b16 %v772
        %v955 = vunpack.c.l.b16 %v773
        %v956 = vunpack.c.h.b16 %v773
        %v957 = vunpack.c.l.b16 %v774
        %v958 = vunpack.c.h.b16 %v774
        %v959 = vunpack.c.l.b16 %v775
        %v960 = vunpack.c.h.b16 %v775
        %v961 = vunpack.c.l.b16 %v776
        %v962 = vunpack.c.h.b16 %v776
        %v963 = vunpack.c.l.b16 %v777
        %v964 = vunpack.c.h.b16 %v777
        %v965 = vunpack.c.l.b16 %v778
        %v966 = vunpack.c.h.b16 %v778
        %v967 = vunpack.c.l.b16 %v779
        %v968 = vunpack.c.h.b16 %v779
        %v969 = vunpack.c.l.b16 %v780
        %v970 = vunpack.c.h.b16 %v780
        %v971 = vunpack.c.l.b16 %v781
        %v972 = vunpack.c.h.b16 %v781
        %v973 = vunpack.c.l.b16 %v782
        %v974 = vunpack.c.h.b16 %v782
        %v975 = vunpack.c.l.b16 %v783
        %v976 = vunpack.c.h.b16 %v783
        %v977 = vunpack.c.l.b16 %v784
        %v978 = vunpack.c.h.b16 %v784
        %v979 = vunpack.c.l.b16 %v785
        %v980 = vunpack.c.h.b16 %v785
        %v981 = vunpack.c.l.b16 %v786
        %v982 = vunpack.c.h.b16 %v786
        %v983 = vunpack.c.l.b16 %v787
        %v984 = vunpack.c.h.b16 %v787
        %v985 = vunpack.c.l.b16 %v788
        %v986 = vunpack.c.h.b16 %v788
        %v987 = vunpack.c.l.b16 %v789
        %v988 = vunpack.c.h.b16 %v789
        %v989 = vunpack.c.l.b16 %v790
        %v990 = vunpack.c.h.b16 %v790
        %v991 = vunpack.c.l.b16 %v791
        %v992 = vunpack.c.h.b16 %v791
        %v993 = vunpack.c.l.b16 %v792
        %v994 = vunpack.c.h.b16 %v792
        %v995 = vunpack.c.l.b16 %v793
        %v996 = vunpack.c.h.b16 %v793
        %v997 = vunpack.c.l.b16 %v794
        %v998 = vunpack.c.h.b16 %v794
        %v999 = vunpack.c.l.b16 %v795
        %v1000 = vunpack.c.h.b16 %v795
        %v1001 = vunpack.c.l.b16 %v796
        %v1002 = vunpack.c.h.b16 %v796
        %v1003 = vunpack.c.l.b16 %v797
        %v1004 = vunpack.c.h.b16 %v797
        %v1005 = vunpack.c.l.b16 %v798
        %v1006 = vunpack.c.h.b16 %v798
        %v1007 = vunpack.c.l.b16 %v799
        %v1008 = vunpack.c.h.b16 %v799
        %v1009 = vunpack.c.l.b16 %v800
        %v1010 = vunpack.c.h.b16 %v800
        %v1011 = vunpack.c.l.b16 %v801
        %v1012 = vunpack.c.h.b16 %v801
        %v1013 = vunpack.c.l.b16 %v802
        %v1014 = vunpack.c.h.b16 %v802
        %v1015 = vunpack.c.l.b16 %v803
        %v1016 = vunpack.c.h.b16 %v803
        %v1017 = vunpack.c.l.b16 %v804
        %v1018 = vunpack.c.h.b16 %v804
        %v1019 = vunpack.c.l.b16 %v805
        %v1020 = vunpack.c.h.b16 %v805
        %v1021 = vunpack.c.l.b16 %v806
        %v1022 = vunpack.c.h.b16 %v806
        %v1023 = vunpack.c.l.b16 %v807
        %v1024 = vunpack.c.h.b16 %v807
        %v1025 = vunpack.c.l.b16 %v808
        %v1026 = vunpack.c.h.b16 %v808
        %v1027 = vpack.c.b16 %v903, %v899
        %v1028 = vpack.c.b16 %v904, %v900
        %v1029 = vpack.c.b16 %v905, %v901
        %v1030 = vpack.c.b16 %v906, %v902
        %v1031 = vpack.c.b16 %v911, %v907
        %v1032 = vpack.c.b16 %v912, %v908
        %v1033 = vpack.c.b16 %v913, %v909
        %v1034 = vpack.c.b16 %v914, %v910
        %v1035 = vpack.c.b16 %v919, %v915
        %v1036 = vpack.c.b16 %v920, %v916
        %v1037 = vpack.c.b16 %v921, %v917
        %v1038 = vpack.c.b16 %v922, %v918
        %v1039 = vpack.c.b16 %v927, %v923
        %v1040 = vpack.c.b16 %v928, %v924
        %v1041 = vpack.c.b16 %v929, %v925
        %v1042 = vpack.c.b16 %v930, %v926
        %v1043 = vpack.c.b16 %v935, %v931
        %v1044 = vpack.c.b16 %v936, %v932
        %v1045 = vpack.c.b16 %v937, %v933
        %v1046 = vpack.c.b16 %v938, %v934
        %v1047 = vpack.c.b16 %v943, %v939
        %v1048 = vpack.c.b16 %v944, %v940
        %v1049 = vpack.c.b16 %v945, %v941
        %v1050 = vpack.c.b16 %v946, %v942
        %v1051 = vpack.c.b16 %v951, %v947
        %v1052 = vpack.c.b16 %v952, %v948
        %v1053 = vpack.c.b16 %v953, %v949
        %v1054 = vpack.c.b16 %v954, %v950
        %v1055 = vpack.c.b16 %v959, %v955
        %v1056 = vpack.c.b16 %v960, %v956
        %v1057 = vpack.c.b16 %v961, %v957
        %v1058 = vpack.c.b16 %v962, %v958
        %v1059 = vpack.c.b16 %v967, %v963
        %v1060 = vpack.c.b16 %v968, %v964
        %v1061 = vpack.c.b16 %v969, %v965
        %v1062 = vpack.c.b16 %v970, %v966
        %v1063 = vpack.c.b16 %v975, %v971
        %v1064 = vpack.c.b16 %v976, %v972
        %v1065 = vpack.c.b16 %v977, %v973
        %v1066 = vpack.c.b16 %v978, %v974
        %v1067 = vpack.c.b16 %v983, %v979
        %v1068 = vpack.c.b16 %v984, %v980
        %v1069 = vpack.c.b16 %v985, %v981
        %v1070 = vpack.c.b16 %v986, %v982
        %v1071 = vpack.c.b16 %v991, %v987
        %v1072 = vpack.c.b16 %v992, %v988
        %v1073 = vpack.c.b16 %v993, %v989
        %v1074 = vpack.c.b16 %v994, %v990
        %v1075 = vpack.c.b16 %v999, %v995
        %v1076 = vpack.c.b16 %v1000, %v996
        %v1077 = vpack.c.b16 %v1001, %v997
        %v1078 = vpack.c.b16 %v1002, %v998
        %v1079 = vpack.c.b16 %v1007, %v1003
        %v1080 = vpack.c.b16 %v1008, %v1004
        %v1081 = vpack.c.b16 %v1009, %v1005
        %v1082 = vpack.c.b16 %v1010, %v1006
        %v1083 = vpack.c.b16 %v1015, %v1011
        %v1084 = vpack.c.b16 %v1016, %v1012
        %v1085 = vpack.c.b16 %v1017, %v1013
        %v1086 = vpack.c.b16 %v1018, %v1014
        %v1087 = vpack.c.b16 %v1023, %v1019
        %v1088 = vpack.c.b16 %v1024, %v1020
        %v1089 = vpack.c.b16 %v1025, %v1021
        %v1090 = vpack.c.b16 %v1026, %v1022
        %v1156 = vlaneseq
        %v1157 = vshrl.u32 %v1156, 7
        %v1158 = vsub.s32 0, %v1157
        %v1159 = vrot.slane %v809, %v1158
        %v1160 = vlaneseq
        %v1161 = vshrl.u32 %v1160, 7
        %v1162 = vsub.s32 1, %v1161
        %v1163 = vrot.slane %v809, %v1162
        %v1164 = vlaneseq
        %v1165 = vshrl.u32 %v1164, 7
        %v1166 = vsub.s32 2, %v1165
        %v1167 = vrot.slane %v809, %v1166
        %v1168 = vlaneseq
        %v1169 = vshrl.u32 %v1168, 7
        %v1170 = vsub.s32 3, %v1169
        %v1171 = vrot.slane %v809, %v1170
        %1176 = vmatprep.subr.bf16.mxu0 %v1028
        %1177 = vmatpush1.bf16.msra.mxu0 %v1027
        %1178 = vmatprep.subr.bf16.mxu0 %v1032
        %1179 = vmatpush1.bf16.msra.mxu0 %v1031
        %1180 = vmatprep.subr.bf16.mxu0 %v1036
        %1181 = vmatpush1.bf16.msra.mxu0 %v1035
        %1182 = vmatprep.subr.bf16.mxu0 %v1040
        %1183 = vmatpush1.bf16.msra.mxu0 %v1039
        %1184 = vmatprep.subr.bf16.mxu0 %v1044
        %1185 = vmatpush1.bf16.msra.mxu0 %v1043
        %1186 = vmatprep.subr.bf16.mxu0 %v1048
        %1187 = vmatpush1.bf16.msra.mxu0 %v1047
        %1188 = vmatprep.subr.bf16.mxu0 %v1052
        %1189 = vmatpush1.bf16.msra.mxu0 %v1051
        %1190 = vmatprep.subr.bf16.mxu0 %v1056
        %1191 = vmatpush1.bf16.msra.mxu0 %v1055
        %1192 = vmatprep.subr.bf16.mxu0 %v1060
        %1193 = vmatpush1.bf16.msra.mxu0 %v1059
        %1194 = vmatprep.subr.bf16.mxu0 %v1064
        %1195 = vmatpush1.bf16.msra.mxu0 %v1063
        %1196 = vmatprep.subr.bf16.mxu0 %v1068
        %1197 = vmatpush1.bf16.msra.mxu0 %v1067
        %1198 = vmatprep.subr.bf16.mxu0 %v1072
        %1199 = vmatpush1.bf16.msra.mxu0 %v1071
        %1200 = vmatprep.subr.bf16.mxu0 %v1076
        %1201 = vmatpush1.bf16.msra.mxu0 %v1075
        %1202 = vmatprep.subr.bf16.mxu0 %v1080
        %1203 = vmatpush1.bf16.msra.mxu0 %v1079
        %1204 = vmatprep.subr.bf16.mxu0 %v1084
        %1205 = vmatpush1.bf16.msra.mxu0 %v1083
        %1206 = vmatprep.subr.bf16.mxu0 %v1088
        %1207 = vmatpush1.bf16.msra.mxu0 %v1087
        %1208 = vmatprep.mubr.bf16.mxu0 %v832
        %1209 = vmatmul.mubr.bf16.gmra.mrb[0].mxu0 %v825
        %v1210 = vpop.f32.mrb[0].mxu0
        %v1211 = vadd.f32 %v1159, %v1210
        %v1212 = vpop.f32.mrb[0].mxu0
        %v1213 = vadd.f32 %v1163, %v1212
        %v1214 = vpop.f32.mrb[0].mxu0
        %v1215 = vpop.f32.mrb[0].mxu0
        %1216 = vdwg.mxu0
        %1217 = vmatprep.subr.bf16.mxu0 %v1030
        %1218 = vmatpush1.bf16.msra.mxu0 %v1029
        %1219 = vmatprep.subr.bf16.mxu0 %v1034
        %1220 = vmatpush1.bf16.msra.mxu0 %v1033
        %1221 = vmatprep.subr.bf16.mxu0 %v1038
        %1222 = vmatpush1.bf16.msra.mxu0 %v1037
        %1223 = vmatprep.subr.bf16.mxu0 %v1042
        %1224 = vmatpush1.bf16.msra.mxu0 %v1041
        %1225 = vmatprep.subr.bf16.mxu0 %v1046
        %1226 = vmatpush1.bf16.msra.mxu0 %v1045
        %1227 = vmatprep.subr.bf16.mxu0 %v1050
        %1228 = vmatpush1.bf16.msra.mxu0 %v1049
        %1229 = vmatprep.subr.bf16.mxu0 %v1054
        %1230 = vmatpush1.bf16.msra.mxu0 %v1053
        %1231 = vmatprep.subr.bf16.mxu0 %v1058
        %1232 = vmatpush1.bf16.msra.mxu0 %v1057
        %1233 = vmatprep.subr.bf16.mxu0 %v1062
        %1234 = vmatpush1.bf16.msra.mxu0 %v1061
        %1235 = vmatprep.subr.bf16.mxu0 %v1066
        %1236 = vmatpush1.bf16.msra.mxu0 %v1065
        %1237 = vmatprep.subr.bf16.mxu0 %v1070
        %1238 = vmatpush1.bf16.msra.mxu0 %v1069
        %1239 = vmatprep.subr.bf16.mxu0 %v1074
        %1240 = vmatpush1.bf16.msra.mxu0 %v1073
        %1241 = vmatprep.subr.bf16.mxu0 %v1078
        %1242 = vmatpush1.bf16.msra.mxu0 %v1077
        %1243 = vmatprep.subr.bf16.mxu0 %v1082
        %1244 = vmatpush1.bf16.msra.mxu0 %v1081
        %1245 = vmatprep.subr.bf16.mxu0 %v1086
        %1246 = vmatpush1.bf16.msra.mxu0 %v1085
        %1247 = vmatprep.subr.bf16.mxu0 %v1090
        %1248 = vmatpush1.bf16.msra.mxu0 %v1089
        %1249 = vmatprep.mubr.bf16.mxu0 %v832
        %1250 = vmatmul.mubr.bf16.gmra.mrb[0].mxu0 %v825
        %v1251 = vpop.f32.mrb[0].mxu0
        %v1252 = vadd.f32 %v1167, %v1251
        %v1253 = vpop.f32.mrb[0].mxu0
        %v1254 = vadd.f32 %v1171, %v1253
        %v1255 = vpop.f32.mrb[0].mxu0
        %v1256 = vpop.f32.mrb[0].mxu0
        %1257 = vdwg.mxu0
        %v1262 = vcombine.low %v1211, %v1213
        %v1263 = vcombine.low %v1252, %v1254
        %v1265 = vunpack.c.l.s4 1966171168
        %v1266 = vunpack.c.0.s8 %v1265
        %v1267 = vlaneseq
        %v1268 = vshrl.u32 %v1267, 7
        %v1269 = vsub.s32 %v1266, %v1268
        %v1270 = vrot.slane %v1262, %v1269
        %v1272 = vunpack.c.l.s4 1966171168
        %v1273 = vunpack.c.0.s8 %v1272
        %v1274 = vlaneseq
        %v1275 = vshrl.u32 %v1274, 7
        %v1276 = vsub.s32 %v1273, %v1275
        %v1277 = vrot.slane %v1263, %v1276
        %v1278 = vcombine.low %v1270, %v1277
        %v1280 = vunpack.c.l.s4 1966171168
        %v1281 = vunpack.c.0.s8 %v1280
        %v1282 = vlaneseq
        %v1283 = vshrl.u32 %v1282, 7
        %v1284 = vsub.s32 %v1281, %v1283
        %v1285 = vrot.slane %v1278, %v1284
        %v1287 = vlaneseq
        %vm1288 = vcmp.ge.s32.totalorder %v1287, 0
        %vm1289 = vcmp.lt.s32.totalorder %v1287, 512
        %vm1290 = vmand %vm1288, %vm1289
        %1291 = vst.msk [vmem:[%s311] sm:$0xf] %vm1290, %v1285
        %s1292 = sand.u32 %s185, 1
        %s1293 = scalar_lea.sflag [#allocation9], %s1292
        %s1294 = sand.u32 %s185, 1
        %s1295 = smul.addr %s1294, 4
        %s1296 = scalar_lea.vmem [#allocation12], %s1295
        // Predicated region
        $region57: #{decoder_classification_forward.1} parent=47 // pred_check
          %p1297 = pneg %p195
        $region58: #{decoder_classification_forward.1} parent=47 // pred_check_branch
          %1299 = sbr.rel (%p1297) target = $region60
        $region59: #{decoder_classification_forward.1} parent=47 // pred_region
          %s1301 = ssub.s32 64, 64
          %1302 = vsyncadd %s1293, %s1301
          %s1303 = smul.addr %s25, 4
          %s1304 = smul.addr %s1303, 16
          %s1305 = scalar_lea.hbm %s7, %s1304
          %s1307 = sshll.u32 %s1296, 4
          %s1308 = int_to_ptr.vmem [resolvable:$true] %s1307
          %1310 = dma.vmem_to_hbm [thread:$0]  %s1308, 64, %s1305, %s1293
        $region60: #{decoder_classification_forward.1} parent=47 // pred_fallthru
          _
      $region48: #{decoder_classification_forward.1} parent=5 // pred_fallthru
        _
      %p1311 = scmp.le.s32.totalorder 2, %s20
      // Predicated region
      $region61: #{decoder_classification_forward.1} parent=5 // pred_check
        %p1312 = pneg %p1311
      $region62: #{decoder_classification_forward.1} parent=5 // pred_check_branch
        %1314 = sbr.rel (%p1312) target = $region64
      $region63: #{decoder_classification_forward.1} parent=5 // pred_region
        %s1315 = ssub.s32 %s20, 2
        // Predicated region
        $region65: #{decoder_classification_forward.1} parent=63 // pred_check
          %p1316 = pneg %p201
        $region66: #{decoder_classification_forward.1} parent=63 // pred_check_branch
          %1318 = sbr.rel (%p1316) target = $region68
        $region67: #{decoder_classification_forward.1} parent=63 // pred_region
          %s1319 = sand.u32 %s186, 1
          %s1320 = scalar_lea.sflag [#allocation9], %s1319
          %s1321 = sand.u32 %s186, 1
          %s1322 = smul.addr %s1321, 4
          %s1323 = scalar_lea.vmem [#allocation12], %s1322
          %1324 = dma.done %s1320, 64
        $region68: #{decoder_classification_forward.1} parent=63 // pred_fallthru
          _
      $region64: #{decoder_classification_forward.1} parent=5 // pred_fallthru
        _
    $region6: #{decoder_classification_forward.1} parent=1 // loop_footer
      %s24 = sadd.s32 1, %s20
    $region7: #{decoder_classification_forward.1} parent=1 // loop_footer_branch
      %19 = sbr.rel target = $region3
    $region8: #{decoder_classification_forward.1} parent=1 // loop_exit
      _
    %1325 = vsyncpa [#allocation8], 1
    %s1326 = scalar_lea.sflag [#allocation8], 1
    %1327 = vsyncpa %s1326, 1
    %1328 = vsyncpa [#allocation11], 1
    %1329 = vsyncpa [#allocation9], 1
    %s1330 = scalar_lea.sflag [#allocation9], 1
    %1331 = vsyncpa %s1330, 1

</llo_original>
